<compile_context>
chip_gen: v7x
topology: tpu7x:2x2x1
jax: 0.10.0
libtpu: 0.0.40
codegen_flags: <defaults>
</compile_context>

<pallas_src>
import functools

import jax
import jax.numpy as jnp
from jax.experimental import pallas as pl
from jax.experimental.pallas import tpu as pltpu


# ---------------------------------------------------------------------------
# Helpers
# ---------------------------------------------------------------------------
def _round_up(x, m):
    return ((x + m - 1) // m) * m


def _device_kind():
    try:
        return jax.devices()[0].device_kind.lower()
    except Exception:
        return ""


def _tensorcores_per_chip():
    # v7x has 2 TensorCores per chip; v4/v5e/v6e expose 1 to a Pallas program.
    return 2 if "7" in _device_kind() else 1


def _default_compute_dtype():
    # bf16 VPU/EUP exists on v6e/v7x; v5e (and older) keep f32 elementwise.
    kind = _device_kind()
    return jnp.bfloat16 if ("v6" in kind or "7" in kind) else jnp.float32


def _apply_activation(name, x):
    if name == "linear":
        return x
    if name == "relu":
        return jnp.maximum(x, 0.0)
    if name == "tanh":
        return jnp.tanh(x)
    if name == "sigmoid":
        return jax.nn.sigmoid(x)
    raise ValueError(f"unsupported activation: {name}")


def _choose_batch_tile(batch, batch_tile, num_cores):
    """Pick the batch tile.

    * Small batches (or single-core batches that fit one tile): one full-array
      block (no grid overhead, shape constraint satisfied by full-dim rule).
    * Otherwise: tile rows in multiples of 256 (MXU M fill), capped at
      `batch_tile`, and the number of grid steps forced to a multiple of
      `num_cores` so a megacore chip (v7x) keeps both TensorCores busy.
    """
    if batch < 2 * 256 or (num_cores <= 1 and batch <= batch_tile):
        return batch
    steps = max(pl.cdiv(batch, batch_tile), num_cores)
    if steps % num_cores:
        steps = _round_up(steps, num_cores)
    tb = min(batch_tile, _round_up(pl.cdiv(batch, steps), 256))
    # Rounding tb up to 256 can shrink the actual step count below the target;
    # if that breaks the multiple-of-num_cores property, fall back to 16-row
    # granularity (still sublane/bf16-tile aligned).
    if pl.cdiv(batch, tb) % num_cores:
        tb = min(batch_tile, _round_up(pl.cdiv(batch, steps), 16))
    return tb


# ---------------------------------------------------------------------------
# Kernel
# ---------------------------------------------------------------------------
def _actor_mlp_kernel(activations, compute_dtype, *refs):
    """Fused MLP forward over one batch tile.

    refs = (x_ref, w0_ref, b0_ref, w1_ref, b1_ref, ..., out_ref)
      x_ref : (TB, layers[0])           f32   VMEM
      wi_ref: (layers[i], layers[i+1])  bf16  VMEM (pre-transposed, resident)
      bi_ref: (1, layers[i+1])          f32   VMEM (resident)
      out   : (TB, out_padded)          bf16  VMEM (lane-dense, >=128 wide)
    """
    x_ref = refs[0]
    out_ref = refs[-1]
    param_refs = refs[1:-1]

    x = x_ref[...]
    for i, act in enumerate(activations):
        w = param_refs[2 * i][...]                      # bf16 (in, out)
        b = param_refs[2 * i + 1][...]                  # f32  (1, out)
        # MXU matmul: bf16 operands, f32 accumulation.
        y = jnp.dot(x.astype(w.dtype), w, preferred_element_type=jnp.float32)
        # Elementwise phase in compute_dtype (bf16 on v6e/v7x, f32 on v5e).
        x = _apply_activation(act,
                              y.astype(compute_dtype) + b.astype(compute_dtype))
    out_ref[...] = x.astype(out_ref.dtype)


# ---------------------------------------------------------------------------
# One-time parameter preparation (hoisted out of the forward hot path)
# ---------------------------------------------------------------------------
def prepare_actor_params(weights, biases, *, param_dtype=jnp.bfloat16,
                         lane_pad=128):
    """Convert PyTorch-convention params to kernel layout, once.

      - weights (out, in) -> (in, out)  (lane-dense x @ W on the MXU)
      - biases  (out,)    -> (1, out)   kept in f32
      - final layer's output dim zero-padded to a multiple of `lane_pad`
        so the output store is unmasked / lane-dense
      - weights cast to `param_dtype` (bf16 by default)
    """
    n = len(weights)
    out_dim = int(weights[-1].shape[0])
    out_padded = _round_up(max(out_dim, lane_pad), lane_pad)

    prepped = []
    for i, (w, b) in enumerate(zip(weights, biases)):
        wt = jnp.transpose(w)              # (in, out)
        bt = b.reshape(1, -1)              # (1, out)
        if i == n - 1 and out_padded != wt.shape[1]:
            pad = out_padded - wt.shape[1]
            wt = jnp.pad(wt, ((0, 0), (0, pad)))
            bt = jnp.pad(bt, ((0, 0), (0, pad)))
        prepped.append(jnp.asarray(wt, dtype=param_dtype))
        prepped.append(jnp.asarray(bt, dtype=jnp.float32))
    return tuple(prepped), out_dim, out_padded


# ---------------------------------------------------------------------------
# Forward wrapper
# ---------------------------------------------------------------------------
def actor_net_forward(state, prepped_params, activations, out_dim, out_padded,
                      *, batch_tile=1024, compute_dtype=None,
                      out_store_dtype=jnp.bfloat16):
    """Run the ActorNet forward pass as one Pallas call.

    state          : (B, layers[0]) float32 (bf16 also accepted as-is; no
                     wrapper-side cast/pad is added on purpose)
    prepped_params : output of prepare_actor_params (weights bf16 (in,out),
                     biases f32 (1,out), last layer lane-padded)
    """
    assert 2 * len(activations) == len(prepped_params)
    batch, in_dim = state.shape
    if compute_dtype is None:
        compute_dtype = _default_compute_dtype()

    num_cores = _tensorcores_per_chip()
    tb = _choose_batch_tile(batch, batch_tile, num_cores)
    grid = (pl.cdiv(batch, tb),)

    in_specs = [pl.BlockSpec((tb, in_dim), lambda i: (i, 0))]
    for p in prepped_params:
        # Same block index every grid step -> VMEM-resident parameters.
        in_specs.append(pl.BlockSpec(p.shape, lambda i: (0, 0)))
    out_specs = pl.BlockSpec((tb, out_padded), lambda i: (i, 0))

    # Advisory cost estimate for XLA's scheduler (useful widths, not padded;
    # weights counted once since they stay VMEM-resident across grid steps).
    flops = 0
    transcendentals = 0
    bytes_accessed = state.size * state.dtype.itemsize
    n_layers = len(activations)
    for li, act in enumerate(activations):
        w = prepped_params[2 * li]
        width = out_dim if li == n_layers - 1 else w.shape[1]
        flops += 2 * batch * w.shape[0] * width
        if act in ("tanh", "sigmoid"):
            transcendentals += batch * width
        bytes_accessed += (w.size * w.dtype.itemsize +
                           prepped_params[2 * li + 1].size * 4)
    bytes_accessed += batch * out_padded * jnp.dtype(out_store_dtype).itemsize

    kernel = functools.partial(_actor_mlp_kernel, tuple(activations),
                               compute_dtype)

    out = pl.pallas_call(
        kernel,
        out_shape=jax.ShapeDtypeStruct((batch, out_padded), out_store_dtype),
        grid=grid,
        in_specs=in_specs,
        out_specs=out_specs,
        compiler_params=pltpu.CompilerParams(
            dimension_semantics=("parallel",),        # megacore on v7x
            vmem_limit_bytes=32 * 1024 * 1024),       # safe headroom on v5e
        cost_estimate=pl.CostEstimate(
            flops=int(flops),
            transcendentals=int(transcendentals),
            bytes_accessed=int(bytes_accessed)),
    )(state, *prepped_params)

    # Slice off the lane padding; return f32 like the PyTorch module.
    out = out[:, :out_dim] if out_padded != out_dim else out
    return out.astype(jnp.float32)


# ---------------------------------------------------------------------------
# Deterministic parameter initialization (mirrors ActorNet.__init__)
# ---------------------------------------------------------------------------
def init_actor_params(key, layers, fl_init):
    """Replicates:
         - fan_in_init (uniform +/- 1/sqrt(fan_in)) for all but the last layer
         - uniform(-fl_init, fl_init) on the final layer's weight and bias
       Weights stored in PyTorch (out, in) convention.
    """
    n_layers = len(layers) - 1
    weights, biases = [], []
    for i in range(n_layers):
        fan_in, fan_out = layers[i], layers[i + 1]
        key, kw, kb = jax.random.split(key, 3)
        if i + 1 == n_layers:
            rng = fl_init
        else:
            rng = 1.0 / jnp.sqrt(float(fan_in))
        w = jax.random.uniform(kw, (fan_out, fan_in), jnp.float32, -rng, rng)
        b = jax.random.uniform(kb, (fan_out,), jnp.float32, -rng, rng)
        weights.append(w)
        biases.append(b)
    return weights, biases


# ---------------------------------------------------------------------------
# Reference (pure JAX, same dtype policy) for sanity check
# ---------------------------------------------------------------------------
def actor_net_ref(state, weights, biases, activations, *,
                  param_dtype=jnp.bfloat16, compute_dtype=jnp.float32,
                  out_store_dtype=jnp.bfloat16):
    x = state.astype(jnp.float32)
    for w, b, act in zip(weights, biases, activations):
        y = jnp.dot(x.astype(param_dtype), jnp.transpose(w).astype(param_dtype),
                    preferred_element_type=jnp.float32)
        x = _apply_activation(
            act, y.astype(compute_dtype) + b.reshape(1, -1).astype(compute_dtype))
    return x.astype(out_store_dtype).astype(jnp.float32)


if __name__ == "__main__":
    # Small DDPG-style actor: state_dim=32 -> 64 -> 64 -> action_dim=8
    layers = [32, 64, 64, 8]
    activations = ["relu", "relu", "tanh"]
    fl_init = 0.003

    key = jax.random.PRNGKey(0)
    key, k_params = jax.random.split(key)
    weights, biases = init_actor_params(k_params, layers, fl_init)

    # One-time parameter prep (transpose / pad / cast hoisted out of forward).
    prepped, out_dim, out_padded = prepare_actor_params(weights, biases)
    compute_dtype = _default_compute_dtype()

    # --- small-batch check ---------------------------------------------------
    batch = 8
    key, k_state = jax.random.split(key)
    state = jax.random.normal(k_state, (batch, layers[0]), jnp.float32)

    out = actor_net_forward(state, prepped, activations, out_dim, out_padded,
                            compute_dtype=compute_dtype)
    out = jax.block_until_ready(out)
    ref = actor_net_ref(state, weights, biases, activations,
                        compute_dtype=compute_dtype)
    assert out.shape == (batch, layers[-1])
    assert jnp.allclose(out, ref, atol=2e-2, rtol=2e-2), "mismatch (B=8)"

    # --- multi-tile check (exercises the batch grid + partial last block) ----
    batch2 = 1040
    key, k_state2 = jax.random.split(key)
    state2 = jax.random.normal(k_state2, (batch2, layers[0]), jnp.float32)

    out2 = actor_net_forward(state2, prepped, activations, out_dim, out_padded,
                             compute_dtype=compute_dtype)
    out2 = jax.block_until_ready(out2)
    ref2 = actor_net_ref(state2, weights, biases, activations,
                         compute_dtype=compute_dtype)
    assert out2.shape == (batch2, layers[-1])
    assert jnp.allclose(out2, ref2, atol=2e-2, rtol=2e-2), "mismatch (B=1040)"

    print("KERNEL_OK")
</pallas_src>

<mosaic_0001>
module attributes {stable_mosaic.version = 11 : i64} {
  func.func @_actor_mlp_kernel(%arg0: i32, %arg1: memref<8x32xf32, #tpu.memory_space<vmem>>, %arg2: memref<32x64xbf16, #tpu.memory_space<vmem>>, %arg3: memref<1x64xf32, #tpu.memory_space<vmem>>, %arg4: memref<64x64xbf16, #tpu.memory_space<vmem>>, %arg5: memref<1x64xf32, #tpu.memory_space<vmem>>, %arg6: memref<64x128xbf16, #tpu.memory_space<vmem>>, %arg7: memref<1x128xf32, #tpu.memory_space<vmem>>, %arg8: memref<8x128xbf16, #tpu.memory_space<vmem>>) attributes {dimension_semantics = [#tpu.dimension_semantics<parallel>], iteration_bounds = array<i64: 1>, scalar_prefetch = 0 : i64, scratch_operands = 0 : i64, tpu.core_type = #tpu.core_type<tc>, window_params = [{transform_indices = @transform_0, window_bounds = array<i64: 8, 32>}, {pipeline_mode = #tpu.pipeline_mode<synchronous>, transform_indices = @transform_1, window_bounds = array<i64: 32, 64>}, {pipeline_mode = #tpu.pipeline_mode<synchronous>, transform_indices = @transform_2, window_bounds = array<i64: 1, 64>}, {pipeline_mode = #tpu.pipeline_mode<synchronous>, transform_indices = @transform_3, window_bounds = array<i64: 64, 64>}, {pipeline_mode = #tpu.pipeline_mode<synchronous>, transform_indices = @transform_4, window_bounds = array<i64: 1, 64>}, {pipeline_mode = #tpu.pipeline_mode<synchronous>, transform_indices = @transform_5, window_bounds = array<i64: 64, 128>}, {pipeline_mode = #tpu.pipeline_mode<synchronous>, transform_indices = @transform_6, window_bounds = array<i64: 1, 128>}, {transform_indices = @transform_7, window_bounds = array<i64: 8, 128>}]} {
    %c0 = arith.constant 0 : index
    %c0_0 = arith.constant 0 : index
    %0 = vector.load %arg1[%c0, %c0_0] : memref<8x32xf32, #tpu.memory_space<vmem>>, vector<8x32xf32>
    %c0_1 = arith.constant 0 : index
    %c0_2 = arith.constant 0 : index
    %1 = vector.load %arg2[%c0_1, %c0_2] : memref<32x64xbf16, #tpu.memory_space<vmem>>, vector<32x64xbf16>
    %c0_3 = arith.constant 0 : index
    %c0_4 = arith.constant 0 : index
    %2 = vector.load %arg3[%c0_3, %c0_4] : memref<1x64xf32, #tpu.memory_space<vmem>>, vector<1x64xf32>
    %3 = arith.truncf %0 : vector<8x32xf32> to vector<8x32xbf16>
    %cst = arith.constant dense<0.000000e+00> : vector<8x64xf32>
    %4 = tpu.matmul %3, %1, %cst {dimension_numbers = #tpu.dot_dimension_numbers<[1], [0], [0], [1], [0, 0, 1, 1], [], []>} : vector<8x32xbf16>, vector<32x64xbf16>, vector<8x64xf32> -> vector<8x64xf32>
    %5 = vector.broadcast %2 : vector<1x64xf32> to vector<8x64xf32>
    %6 = arith.addf %4, %5 : vector<8x64xf32>
    %cst_5 = arith.constant 0.000000e+00 : f32
    %7 = vector.broadcast %cst_5 : f32 to vector<8x64xf32>
    %8 = arith.maximumf %6, %7 : vector<8x64xf32>
    %c0_6 = arith.constant 0 : index
    %c0_7 = arith.constant 0 : index
    %9 = vector.load %arg4[%c0_6, %c0_7] : memref<64x64xbf16, #tpu.memory_space<vmem>>, vector<64x64xbf16>
    %c0_8 = arith.constant 0 : index
    %c0_9 = arith.constant 0 : index
    %10 = vector.load %arg5[%c0_8, %c0_9] : memref<1x64xf32, #tpu.memory_space<vmem>>, vector<1x64xf32>
    %11 = arith.truncf %8 : vector<8x64xf32> to vector<8x64xbf16>
    %cst_10 = arith.constant dense<0.000000e+00> : vector<8x64xf32>
    %12 = tpu.matmul %11, %9, %cst_10 {dimension_numbers = #tpu.dot_dimension_numbers<[1], [0], [0], [1], [0, 0, 1, 1], [], []>} : vector<8x64xbf16>, vector<64x64xbf16>, vector<8x64xf32> -> vector<8x64xf32>
    %13 = vector.broadcast %10 : vector<1x64xf32> to vector<8x64xf32>
    %14 = arith.addf %12, %13 : vector<8x64xf32>
    %cst_11 = arith.constant 0.000000e+00 : f32
    %15 = vector.broadcast %cst_11 : f32 to vector<8x64xf32>
    %16 = arith.maximumf %14, %15 : vector<8x64xf32>
    %c0_12 = arith.constant 0 : index
    %c0_13 = arith.constant 0 : index
    %17 = vector.load %arg6[%c0_12, %c0_13] : memref<64x128xbf16, #tpu.memory_space<vmem>>, vector<64x128xbf16>
    %c0_14 = arith.constant 0 : index
    %c0_15 = arith.constant 0 : index
    %18 = vector.load %arg7[%c0_14, %c0_15] : memref<1x128xf32, #tpu.memory_space<vmem>>, vector<1x128xf32>
    %19 = arith.truncf %16 : vector<8x64xf32> to vector<8x64xbf16>
    %cst_16 = arith.constant dense<0.000000e+00> : vector<8x128xf32>
    %20 = tpu.matmul %19, %17, %cst_16 {dimension_numbers = #tpu.dot_dimension_numbers<[1], [0], [0], [1], [0, 0, 1, 1], [], []>} : vector<8x64xbf16>, vector<64x128xbf16>, vector<8x128xf32> -> vector<8x128xf32>
    %21 = vector.broadcast %18 : vector<1x128xf32> to vector<8x128xf32>
    %22 = arith.addf %20, %21 : vector<8x128xf32>
    %23 = math.tanh %22 : vector<8x128xf32>
    %24 = arith.truncf %23 : vector<8x128xf32> to vector<8x128xbf16>
    %c0_17 = arith.constant 0 : index
    %c0_18 = arith.constant 0 : index
    %25 = vector.load %arg8[%c0_17, %c0_18] : memref<8x128xbf16, #tpu.memory_space<vmem>>, vector<8x128xbf16>
    tpu.vector_store %arg8[%c0_17, %c0_18], %24 {strides = array<i32>} : memref<8x128xbf16, #tpu.memory_space<vmem>>, vector<8x128xbf16>,
    return
  }
  func.func @transform_0(%arg0: i32) -> (i32, i32) {
    %c0_i32 = arith.constant 0 : i32
    %c0_i32_0 = arith.constant 0 : i32
    return %arg0, %c0_i32 : i32, i32
  }
  func.func @transform_1(%arg0: i32) -> (i32, i32) {
    %c0_i32 = arith.constant 0 : i32
    %c0_i32_0 = arith.constant 0 : i32
    %c0_i32_1 = arith.constant 0 : i32
    return %c0_i32, %c0_i32_0 : i32, i32
  }
  func.func @transform_2(%arg0: i32) -> (i32, i32) {
    %c0_i32 = arith.constant 0 : i32
    %c0_i32_0 = arith.constant 0 : i32
    %c0_i32_1 = arith.constant 0 : i32
    return %c0_i32, %c0_i32_0 : i32, i32
  }
  func.func @transform_3(%arg0: i32) -> (i32, i32) {
    %c0_i32 = arith.constant 0 : i32
    %c0_i32_0 = arith.constant 0 : i32
    %c0_i32_1 = arith.constant 0 : i32
    return %c0_i32, %c0_i32_0 : i32, i32
  }
  func.func @transform_4(%arg0: i32) -> (i32, i32) {
    %c0_i32 = arith.constant 0 : i32
    %c0_i32_0 = arith.constant 0 : i32
    %c0_i32_1 = arith.constant 0 : i32
    return %c0_i32, %c0_i32_0 : i32, i32
  }
  func.func @transform_5(%arg0: i32) -> (i32, i32) {
    %c0_i32 = arith.constant 0 : i32
    %c0_i32_0 = arith.constant 0 : i32
    %c0_i32_1 = arith.constant 0 : i32
    return %c0_i32, %c0_i32_0 : i32, i32
  }
  func.func @transform_6(%arg0: i32) -> (i32, i32) {
    %c0_i32 = arith.constant 0 : i32
    %c0_i32_0 = arith.constant 0 : i32
    %c0_i32_1 = arith.constant 0 : i32
    return %c0_i32, %c0_i32_0 : i32, i32
  }
  func.func @transform_7(%arg0: i32) -> (i32, i32) {
    %c0_i32 = arith.constant 0 : i32
    %c0_i32_0 = arith.constant 0 : i32
    return %arg0, %c0_i32 : i32, i32
  }
}

</mosaic_0001>

<llo_original>
// kernel: tpu_custom_call.1
$region0: #{tpu_custom_call.1}
  #allocation0 [shape = 'u32[]', space=smem, size = 0x4, offset = 0x4, fixed_abs, tag = 'smem constant byte address 0x4 - core index']
  #allocation1 [shape = 'u32[144,128]{1,0:T(1,128)}', space=vmem, size = 0x12000, scoped, tag = 'internal scratch']
  %s0 = inlined_call_operand.hbm [shape: f32[8,32], index: 0, kind: input, shape index: {}]
  %s1 = inlined_call_operand.hbm [shape: bf16[32,64], index: 1, kind: input, shape index: {}]
  %s2 = inlined_call_operand.vmem [shape: f32[1,64], index: 2, kind: input, shape index: {}]
  %s3 = inlined_call_operand.hbm [shape: bf16[64,64], index: 3, kind: input, shape index: {}]
  %s4 = inlined_call_operand.vmem [shape: f32[1,64], index: 4, kind: input, shape index: {}]
  %s5 = inlined_call_operand.hbm [shape: bf16[64,128], index: 5, kind: input, shape index: {}]
  %s6 = inlined_call_operand.vmem [shape: f32[1,128], index: 6, kind: input, shape index: {}]
  %s7 = inlined_call_operand.hbm [shape: bf16[8,128], index: 7, kind: output, shape index: {}]
  %s8 = sld [smem:[#allocation0]]
  $region54: #{tpu_custom_call.1} parent=0
    _
  %s10 = ssub.s32 1, %s8
  %s11 = scalar_select 0, %s10, %s8
  $region1: #{tpu_custom_call.1} parent=0
    #allocation2 [shape = 'u8[4096]{0}', space=vmem, size = 0x1000, scoped, tag = 'input window, operand 0, single buffered']
    #allocation3 [shape = 's32[1]{0}', space=sflag, size = 0x4, scoped, tag = 'scoped memory for tpu_custom_call.1']
    #allocation4 [shape = 's32[1]{0}', space=sflag, size = 0x4, scoped, tag = 'scoped memory for tpu_custom_call.1']
    #allocation5 [shape = 'u8[8192]{0}', space=vmem, size = 0x2000, scoped, tag = 'input window, operand 1, single buffered']
    #allocation6 [shape = 's32[1]{0}', space=sflag, size = 0x4, scoped, tag = 'scoped memory for tpu_custom_call.1']
    #allocation7 [shape = 'u8[16384]{0}', space=vmem, size = 0x4000, scoped, tag = 'input window, operand 3, single buffered']
    #allocation8 [shape = 'u8[16384]{0}', space=vmem, size = 0x4000, scoped, tag = 'input window, operand 5, single buffered']
    #allocation9 [shape = 's32[1]{0}', space=sflag, size = 0x4, scoped, tag = 'scoped memory for tpu_custom_call.1']
    #allocation10 [shape = 'u8[2048]{0}', space=vmem, size = 0x800, scoped, tag = 'output window, operand 0, single buffered']
    %12 = vsyncpa [#allocation3], 0
    %13 = vsyncpa [#allocation6], 0
    %14 = vsyncpa [#allocation9], 0
    %15 = vsyncpa [#allocation4], 0
    // Predicated region
    $region2: #{tpu_custom_call.1} parent=1 // pred_check
      _
    $region3: #{tpu_custom_call.1} parent=1 // pred_check_branch
      %17 = sbr.rel (0) target = $region5
    $region4: #{tpu_custom_call.1} parent=1 // pred_region
      %s19 = ssub.s32 128, 128
      %20 = vsyncadd [#allocation3], %s19
      %s22 = sshll.u32 [#allocation2], 4
      %s23 = int_to_ptr.vmem [resolvable:$true] %s22
      %25 = dma.hbm_to_vmem [thread:$0]  %s0, 128, %s23, [#allocation3]
    $region5: #{tpu_custom_call.1} parent=1 // pred_fallthru
      _
    // Predicated region
    $region6: #{tpu_custom_call.1} parent=1 // pred_check
      _
    $region7: #{tpu_custom_call.1} parent=1 // pred_check_branch
      %27 = sbr.rel (0) target = $region9
    $region8: #{tpu_custom_call.1} parent=1 // pred_region
      %s29 = ssub.s32 256, 256
      %30 = vsyncadd [#allocation6], %s29
      %s31 = sshll.u32 [#allocation5], 4
      %s32 = int_to_ptr.vmem [resolvable:$true] %s31
      %37 = dma.hbm_to_vmem [thread:$0]  %s1, 256, %s32, [#allocation6], 64, 64, 4
    $region9: #{tpu_custom_call.1} parent=1 // pred_fallthru
      _
    // Predicated region
    $region10: #{tpu_custom_call.1} parent=1 // pred_check
      _
    $region11: #{tpu_custom_call.1} parent=1 // pred_check_branch
      %39 = sbr.rel (0) target = $region13
    $region12: #{tpu_custom_call.1} parent=1 // pred_region
      _
    $region13: #{tpu_custom_call.1} parent=1 // pred_fallthru
      _
    // Predicated region
    $region14: #{tpu_custom_call.1} parent=1 // pred_check
      _
    $region15: #{tpu_custom_call.1} parent=1 // pred_check_branch
      %41 = sbr.rel (0) target = $region17
    $region16: #{tpu_custom_call.1} parent=1 // pred_region
      %s43 = ssub.s32 512, 512
      %44 = vsyncadd [#allocation6], %s43
      %s45 = sshll.u32 [#allocation7], 4
      %s46 = int_to_ptr.vmem [resolvable:$true] %s45
      %51 = dma.hbm_to_vmem [thread:$0]  %s3, 512, %s46, [#allocation6], 64, 64, 4
    $region17: #{tpu_custom_call.1} parent=1 // pred_fallthru
      _
    // Predicated region
    $region18: #{tpu_custom_call.1} parent=1 // pred_check
      _
    $region19: #{tpu_custom_call.1} parent=1 // pred_check_branch
      %53 = sbr.rel (0) target = $region21
    $region20: #{tpu_custom_call.1} parent=1 // pred_region
      _
    $region21: #{tpu_custom_call.1} parent=1 // pred_fallthru
      _
    // Predicated region
    $region22: #{tpu_custom_call.1} parent=1 // pred_check
      _
    $region23: #{tpu_custom_call.1} parent=1 // pred_check_branch
      %55 = sbr.rel (0) target = $region25
    $region24: #{tpu_custom_call.1} parent=1 // pred_region
      %s57 = ssub.s32 512, 512
      %58 = vsyncadd [#allocation9], %s57
      %s59 = sshll.u32 [#allocation8], 4
      %s60 = int_to_ptr.vmem [resolvable:$true] %s59
      %65 = dma.hbm_to_vmem [thread:$0]  %s5, 512, %s60, [#allocation9], 64, 64, 4
    $region25: #{tpu_custom_call.1} parent=1 // pred_fallthru
      _
    // Predicated region
    $region26: #{tpu_custom_call.1} parent=1 // pred_check
      _
    $region27: #{tpu_custom_call.1} parent=1 // pred_check_branch
      %67 = sbr.rel (0) target = $region29
    $region28: #{tpu_custom_call.1} parent=1 // pred_region
      _
    $region29: #{tpu_custom_call.1} parent=1 // pred_fallthru
      _
    // Predicated region
    $region30: #{tpu_custom_call.1} parent=1 // pred_check
      _
    $region31: #{tpu_custom_call.1} parent=1 // pred_check_branch
      %69 = sbr.rel (0) target = $region33
    $region32: #{tpu_custom_call.1} parent=1 // pred_region
      %70 = dma.done [#allocation3], 128
    $region33: #{tpu_custom_call.1} parent=1 // pred_fallthru
      _
    // Predicated region
    $region34: #{tpu_custom_call.1} parent=1 // pred_check
      _
    $region35: #{tpu_custom_call.1} parent=1 // pred_check_branch
      %72 = sbr.rel (0) target = $region37
    $region36: #{tpu_custom_call.1} parent=1 // pred_region
      %73 = dma.done [#allocation6], 256
    $region37: #{tpu_custom_call.1} parent=1 // pred_fallthru
      _
    // Predicated region
    $region38: #{tpu_custom_call.1} parent=1 // pred_check
      _
    $region39: #{tpu_custom_call.1} parent=1 // pred_check_branch
      %75 = sbr.rel (0) target = $region41
    $region40: #{tpu_custom_call.1} parent=1 // pred_region
      %76 = dma.done [#allocation6], 512
    $region41: #{tpu_custom_call.1} parent=1 // pred_fallthru
      _
    // Predicated region
    $region42: #{tpu_custom_call.1} parent=1 // pred_check
      _
    $region43: #{tpu_custom_call.1} parent=1 // pred_check_branch
      %78 = sbr.rel (0) target = $region45
    $region44: #{tpu_custom_call.1} parent=1 // pred_region
      %79 = dma.done [#allocation9], 512
    $region45: #{tpu_custom_call.1} parent=1 // pred_fallthru
      _
    %v81 = vld [vmem:[#allocation2] sm:$0xff]
    %v82 = vld [vmem:[#allocation5] sm:$0xf]
    %v83 = vld [vmem:[#allocation5 + $0x4] sm:$0xf]
    %v84 = vld [vmem:[#allocation5 + $0x8] sm:$0xf]
    %v85 = vld [vmem:[#allocation5 + $0xc] sm:$0xf]
    %v86 = vld [vmem:[%s2] sm:$0x1]
    %v87 = vpack.c.bf16 %v81, %v81
    %v89 = vlaneseq
    %v90 = vshrl.u32 %v89, 7
    %v91 = vsub.s32 0, %v90
    %v92 = vrot.slane %v86, %v91
    %v98 = vunpack.c.l.b16 %v82
    %v99 = vunpack.c.l.b16 %v83
    %v100 = vunpack.c.l.b16 %v84
    %v101 = vunpack.c.l.b16 %v85
    %v102 = vpack.c.b16 %v99, %v98
    %v103 = vpack.c.b16 %v101, %v100
    %vm106 = vcmask 261120
    %v108 = vsel %vm106, %v87, 0
    %110 = vmatprep.subr.bf16.mxu0 0
    %111 = vmatpush1.bf16.msra.mxu0 %v102
    %112 = vmatprep.subr.bf16.mxu0 0
    %113 = vmatpush1.bf16.msra.mxu0 %v103
    %114 = vmatprep.subr.bf16.mxu0 0
    %115 = vmatpush1.bf16.msra.mxu0 0
    %116 = vmatprep.subr.bf16.mxu0 0
    %117 = vmatpush1.bf16.msra.mxu0 0
    %118 = vmatprep.subr.bf16.mxu0 0
    %119 = vmatpush1.bf16.msra.mxu0 0
    %120 = vmatprep.subr.bf16.mxu0 0
    %121 = vmatpush1.bf16.msra.mxu0 0
    %122 = vmatprep.subr.bf16.mxu0 0
    %123 = vmatpush1.bf16.msra.mxu0 0
    %124 = vmatprep.subr.bf16.mxu0 0
    %125 = vmatpush1.bf16.msra.mxu0 0
    %126 = vmatprep.subr.bf16.mxu0 0
    %127 = vmatpush1.bf16.msra.mxu0 0
    %128 = vmatprep.subr.bf16.mxu0 0
    %129 = vmatpush1.bf16.msra.mxu0 0
    %130 = vmatprep.subr.bf16.mxu0 0
    %131 = vmatpush1.bf16.msra.mxu0 0
    %132 = vmatprep.subr.bf16.mxu0 0
    %133 = vmatpush1.bf16.msra.mxu0 0
    %134 = vmatprep.subr.bf16.mxu0 0
    %135 = vmatpush1.bf16.msra.mxu0 0
    %136 = vmatprep.subr.bf16.mxu0 0
    %137 = vmatpush1.bf16.msra.mxu0 0
    %138 = vmatprep.subr.bf16.mxu0 0
    %139 = vmatpush1.bf16.msra.mxu0 0
    %140 = vmatprep.subr.bf16.mxu0 0
    %141 = vmatpush1.bf16.msra.mxu0 0
    %142 = vmatprep.mubr.bf16.mxu0 0
    %143 = vmatmul.mubr.bf16.gmra.mrb[0].mxu0 %v108
    %v144 = vpop.f32.mrb[0].mxu0
    %v145 = vadd.f32 %v92, %v144
    %v146 = vpop.f32.mrb[0].mxu0
    %v147 = vpop.f32.mrb[0].mxu0
    %v148 = vpop.f32.mrb[0].mxu0
    %149 = vdwg.mxu0
    %v150 = vmax.f32 %v145, 0.0
    %v151 = vld [vmem:[#allocation7] sm:$0xf]
    %v152 = vld [vmem:[#allocation7 + $0x4] sm:$0xf]
    %v153 = vld [vmem:[#allocation7 + $0x8] sm:$0xf]
    %v154 = vld [vmem:[#allocation7 + $0xc] sm:$0xf]
    %v155 = vld [vmem:[#allocation7 + $0x10] sm:$0xf]
    %v156 = vld [vmem:[#allocation7 + $0x14] sm:$0xf]
    %v157 = vld [vmem:[#allocation7 + $0x18] sm:$0xf]
    %v158 = vld [vmem:[#allocation7 + $0x1c] sm:$0xf]
    %v159 = vld [vmem:[%s4] sm:$0x1]
    %v160 = vpack.c.bf16 %v150, %v150
    %v162 = vlaneseq
    %v163 = vshrl.u32 %v162, 7
    %v164 = vsub.s32 0, %v163
    %v165 = vrot.slane %v159, %v164
    %v175 = vunpack.c.l.b16 %v151
    %v176 = vunpack.c.l.b16 %v152
    %v177 = vunpack.c.l.b16 %v153
    %v178 = vunpack.c.l.b16 %v154
    %v179 = vunpack.c.l.b16 %v155
    %v180 = vunpack.c.l.b16 %v156
    %v181 = vunpack.c.l.b16 %v157
    %v182 = vunpack.c.l.b16 %v158
    %v183 = vpack.c.b16 %v176, %v175
    %v184 = vpack.c.b16 %v178, %v177
    %v185 = vpack.c.b16 %v180, %v179
    %v186 = vpack.c.b16 %v182, %v181
    %vm191 = vcmask 523264
    %v193 = vsel %vm191, %v160, 0
    %195 = vmatprep.subr.bf16.mxu0 0
    %196 = vmatpush1.bf16.msra.mxu0 %v183
    %197 = vmatprep.subr.bf16.mxu0 0
    %198 = vmatpush1.bf16.msra.mxu0 %v184
    %199 = vmatprep.subr.bf16.mxu0 0
    %200 = vmatpush1.bf16.msra.mxu0 %v185
    %201 = vmatprep.subr.bf16.mxu0 0
    %202 = vmatpush1.bf16.msra.mxu0 %v186
    %203 = vmatprep.subr.bf16.mxu0 0
    %204 = vmatpush1.bf16.msra.mxu0 0
    %205 = vmatprep.subr.bf16.mxu0 0
    %206 = vmatpush1.bf16.msra.mxu0 0
    %207 = vmatprep.subr.bf16.mxu0 0
    %208 = vmatpush1.bf16.msra.mxu0 0
    %209 = vmatprep.subr.bf16.mxu0 0
    %210 = vmatpush1.bf16.msra.mxu0 0
    %211 = vmatprep.subr.bf16.mxu0 0
    %212 = vmatpush1.bf16.msra.mxu0 0
    %213 = vmatprep.subr.bf16.mxu0 0
    %214 = vmatpush1.bf16.msra.mxu0 0
    %215 = vmatprep.subr.bf16.mxu0 0
    %216 = vmatpush1.bf16.msra.mxu0 0
    %217 = vmatprep.subr.bf16.mxu0 0
    %218 = vmatpush1.bf16.msra.mxu0 0
    %219 = vmatprep.subr.bf16.mxu0 0
    %220 = vmatpush1.bf16.msra.mxu0 0
    %221 = vmatprep.subr.bf16.mxu0 0
    %222 = vmatpush1.bf16.msra.mxu0 0
    %223 = vmatprep.subr.bf16.mxu0 0
    %224 = vmatpush1.bf16.msra.mxu0 0
    %225 = vmatprep.subr.bf16.mxu0 0
    %226 = vmatpush1.bf16.msra.mxu0 0
    %227 = vmatprep.mubr.bf16.mxu0 0
    %228 = vmatmul.mubr.bf16.gmra.mrb[0].mxu0 %v193
    %v229 = vpop.f32.mrb[0].mxu0
    %v230 = vadd.f32 %v165, %v229
    %v231 = vpop.f32.mrb[0].mxu0
    %v232 = vpop.f32.mrb[0].mxu0
    %v233 = vpop.f32.mrb[0].mxu0
    %234 = vdwg.mxu0
    %v235 = vmax.f32 %v230, 0.0
    %v236 = vld [vmem:[#allocation8] sm:$0xf]
    %v237 = vld [vmem:[#allocation8 + $0x4] sm:$0xf]
    %v238 = vld [vmem:[#allocation8 + $0x8] sm:$0xf]
    %v239 = vld [vmem:[#allocation8 + $0xc] sm:$0xf]
    %v240 = vld [vmem:[#allocation8 + $0x10] sm:$0xf]
    %v241 = vld [vmem:[#allocation8 + $0x14] sm:$0xf]
    %v242 = vld [vmem:[#allocation8 + $0x18] sm:$0xf]
    %v243 = vld [vmem:[#allocation8 + $0x1c] sm:$0xf]
    %v244 = vld [vmem:[%s6] sm:$0x1]
    %v245 = vpack.c.bf16 %v235, %v235
    %v247 = vlaneseq
    %v248 = vshrl.u32 %v247, 7
    %v249 = vsub.s32 0, %v248
    %v250 = vrot.slane %v244, %v249
    %v260 = vunpack.c.l.b16 %v236
    %v261 = vunpack.c.l.b16 %v237
    %v262 = vunpack.c.l.b16 %v238
    %v263 = vunpack.c.l.b16 %v239
    %v264 = vunpack.c.l.b16 %v240
    %v265 = vunpack.c.l.b16 %v241
    %v266 = vunpack.c.l.b16 %v242
    %v267 = vunpack.c.l.b16 %v243
    %v268 = vpack.c.b16 %v261, %v260
    %v269 = vpack.c.b16 %v263, %v262
    %v270 = vpack.c.b16 %v265, %v264
    %v271 = vpack.c.b16 %v267, %v266
    %v277 = vsel %vm191, %v245, 0
    %279 = vmatprep.subr.bf16.mxu0 0
    %280 = vmatpush1.bf16.msra.mxu0 %v268
    %281 = vmatprep.subr.bf16.mxu0 0
    %282 = vmatpush1.bf16.msra.mxu0 %v269
    %283 = vmatprep.subr.bf16.mxu0 0
    %284 = vmatpush1.bf16.msra.mxu0 %v270
    %285 = vmatprep.subr.bf16.mxu0 0
    %286 = vmatpush1.bf16.msra.mxu0 %v271
    %287 = vmatprep.subr.bf16.mxu0 0
    %288 = vmatpush1.bf16.msra.mxu0 0
    %289 = vmatprep.subr.bf16.mxu0 0
    %290 = vmatpush1.bf16.msra.mxu0 0
    %291 = vmatprep.subr.bf16.mxu0 0
    %292 = vmatpush1.bf16.msra.mxu0 0
    %293 = vmatprep.subr.bf16.mxu0 0
    %294 = vmatpush1.bf16.msra.mxu0 0
    %295 = vmatprep.subr.bf16.mxu0 0
    %296 = vmatpush1.bf16.msra.mxu0 0
    %297 = vmatprep.subr.bf16.mxu0 0
    %298 = vmatpush1.bf16.msra.mxu0 0
    %299 = vmatprep.subr.bf16.mxu0 0
    %300 = vmatpush1.bf16.msra.mxu0 0
    %301 = vmatprep.subr.bf16.mxu0 0
    %302 = vmatpush1.bf16.msra.mxu0 0
    %303 = vmatprep.subr.bf16.mxu0 0
    %304 = vmatpush1.bf16.msra.mxu0 0
    %305 = vmatprep.subr.bf16.mxu0 0
    %306 = vmatpush1.bf16.msra.mxu0 0
    %307 = vmatprep.subr.bf16.mxu0 0
    %308 = vmatpush1.bf16.msra.mxu0 0
    %309 = vmatprep.subr.bf16.mxu0 0
    %310 = vmatpush1.bf16.msra.mxu0 0
    %311 = vmatprep.mubr.bf16.mxu0 0
    %312 = vmatmul.mubr.bf16.gmra.mrb[0].mxu0 %v277
    %v313 = vpop.f32.mrb[0].mxu0
    %v314 = vadd.f32 %v250, %v313
    %v315 = vpop.f32.mrb[0].mxu0
    %v316 = vpop.f32.mrb[0].mxu0
    %v317 = vpop.f32.mrb[0].mxu0
    %318 = vdwg.mxu0
    %v319 = vtanh.pop %v314
    %v320 = vpack.c.bf16 %v319, %v319
    %321 = vst [vmem:[#allocation10] sm:$0xf] %v320
    // Predicated region
    $region46: #{tpu_custom_call.1} parent=1 // pred_check
      _
    $region47: #{tpu_custom_call.1} parent=1 // pred_check_branch
      %323 = sbr.rel (0) target = $region49
    $region48: #{tpu_custom_call.1} parent=1 // pred_region
      %s325 = ssub.s32 64, 64
      %326 = vsyncadd [#allocation4], %s325
      %s328 = sshll.u32 [#allocation10], 4
      %s329 = int_to_ptr.vmem [resolvable:$true] %s328
      %331 = dma.vmem_to_hbm [thread:$0]  %s329, 64, %s7, [#allocation4]
    $region49: #{tpu_custom_call.1} parent=1 // pred_fallthru
      _
    // Predicated region
    $region50: #{tpu_custom_call.1} parent=1 // pred_check
      _
    $region51: #{tpu_custom_call.1} parent=1 // pred_check_branch
      %333 = sbr.rel (0) target = $region53
    $region52: #{tpu_custom_call.1} parent=1 // pred_region
      %334 = dma.done [#allocation4], 64
    $region53: #{tpu_custom_call.1} parent=1 // pred_fallthru
      _
    %335 = vsyncpa [#allocation3], 1
    %336 = vsyncpa [#allocation6], 1
    %337 = vsyncpa [#allocation9], 1
    %338 = vsyncpa [#allocation4], 1

</llo_original>
